<compile_context>
chip_gen: v6e
topology: v6e:2x2x1
jax: 0.10.0
libtpu: 0.0.40
codegen_flags: <defaults>
</compile_context>

<pallas_src>
import functools

import jax
import jax.numpy as jnp
from jax.experimental import pallas as pl
from jax.experimental.pallas import tpu as pltpu


def _ru(n, m):
    return ((n + m - 1) // m) * m


# ---------------------------------------------------------------------------
# Packing geometry
# ---------------------------------------------------------------------------
def _weight_geometry(x_dim, hidden_dim, latent_dim):
    """One bf16 slab holding all four weights at 16-row-aligned offsets."""
    lanes = max(_ru(hidden_dim, 128), _ru(2 * latent_dim, 128), _ru(x_dim, 128))
    r_e = 0
    r_h = r_e + _ru(x_dim, 16)          # encoder weight rows = x_dim
    r_d1 = r_h + _ru(hidden_dim, 16)    # fused heads rows    = hidden_dim
    r_d2 = r_d1 + _ru(latent_dim, 16)   # decoder-1 rows      = latent_dim
    rows = _ru(r_d2 + _ru(hidden_dim, 16), 16)
    return lanes, rows, (r_e, r_h, r_d1, r_d2)


def _bias_geometry(x_dim, hidden_dim, latent_dim):
    """One f32 slab holding all biases at 128-lane-aligned offsets."""
    o_e = 0
    o_h = o_e + _ru(hidden_dim, 128)
    o_d1 = o_h + _ru(2 * latent_dim, 128)
    o_d2 = o_d1 + _ru(hidden_dim, 128)
    total = o_d2 + _ru(x_dim, 128)
    return (o_e, o_h, o_d1, o_d2), total


# ---------------------------------------------------------------------------
# Fused kernel
# ---------------------------------------------------------------------------
def vae_fused_kernel(x_ref, eps_ref, w_ref, b_ref, xhat_ref, heads_ref,
                     *, X, H, L, Lp, wrows, boffs):
    r_e, r_h, r_d1, r_d2 = wrows
    o_e, o_h, o_d1, o_d2 = boffs
    f32 = jnp.float32
    bf16 = jnp.bfloat16

    x = x_ref[...]          # bf16, streamed
    eps = eps_ref[...]      # f32

    # Static, aligned slices of the packed slabs (16-row / 128-lane aligned starts).
    w_e = w_ref[r_e:r_e + X, 0:H]
    w_hd = w_ref[r_h:r_h + H, 0:2 * L]
    w_d1 = w_ref[r_d1:r_d1 + L, 0:H]
    w_d2 = w_ref[r_d2:r_d2 + H, 0:X]

    b_e = b_ref[0:1, o_e:o_e + H]
    b_hd = b_ref[0:1, o_h:o_h + 2 * L]
    b_d1 = b_ref[0:1, o_d1:o_d1 + H]
    b_d2 = b_ref[0:1, o_d2:o_d2 + X]

    # ---- Encoder: Linear -> tanh ----
    h = jnp.tanh(jnp.dot(x, w_e, preferred_element_type=f32) + b_e)

    # ---- Fused mean / log_var heads: single [H, 2L] matmul ----
    heads = jnp.dot(h.astype(bf16), w_hd, preferred_element_type=f32) + b_hd
    mean = heads[:, :L]
    log_var = heads[:, L:2 * L]

    # ---- Reparameterization (f32): z = mean + exp(0.5 * log_var) * eps ----
    z = mean + jnp.exp(0.5 * log_var) * eps

    # ---- Decoder: Linear -> tanh -> Linear -> sigmoid ----
    hd = jnp.tanh(jnp.dot(z.astype(bf16), w_d1, preferred_element_type=f32) + b_d1)
    logits = jnp.dot(hd.astype(bf16), w_d2, preferred_element_type=f32) + b_d2
    x_hat = jax.nn.sigmoid(logits)

    # ---- Direct aligned stores (no concatenate / lane rotation). ----
    # Padding lanes of the output blocks are left untouched; the wrapper only
    # slices the valid columns.
    xhat_ref[:, 0:X] = x_hat.astype(xhat_ref.dtype)
    heads_ref[:, 0:L] = mean
    heads_ref[:, Lp:Lp + L] = log_var


# ---------------------------------------------------------------------------
# Wrapper
# ---------------------------------------------------------------------------
def vae_forward(x, eps, packed, *, tb=None):
    """Fused VAE forward. x: [B, X] f32, eps: [B, L] f32 -> (x_hat, mean, log_var)."""
    B, X = x.shape
    L = eps.shape[1]
    H = packed["H"]

    Xp = _ru(X, 128)
    Lp = _ru(L, 128)

    # ---- batch tile: grid-aware so v7x's 2 TCs both get work ----
    gran = 16  # bf16 sublane granule
    if tb is None:
        if B <= gran:
            tb = _ru(max(B, 1), gran)
        else:
            # at least 2 grid steps (megacore sharding), capped for VMEM;
            # raise the cap toward 1024 for very large B if VMEM budget allows.
            tb = min(512, _ru(pl.cdiv(B, 2), gran))
    tb = max(gran, _ru(tb, gran))
    b_pad = _ru(B, tb)

    x_bf = x.astype(jnp.bfloat16)          # stream activations in bf16
    eps_f = eps
    if b_pad != B:
        x_bf = jnp.pad(x_bf, ((0, b_pad - B), (0, 0)))
        eps_f = jnp.pad(eps_f, ((0, b_pad - B), (0, 0)))

    grid = (b_pad // tb,)

    w_slab = packed["w_slab"]
    b_all = packed["b_all"]

    kernel = functools.partial(
        vae_fused_kernel,
        X=X, H=H, L=L, Lp=Lp, wrows=packed["wrows"], boffs=packed["boffs"])

    # ---- explicit VMEM budget: double-buffered streamed tiles + resident slabs ----
    stream_bytes = tb * (X * 2 + L * 4 + Xp * 2 + 2 * Lp * 4)
    resident_bytes = int(w_slab.size) * 2 + int(b_all.size) * 4
    budget = 2 * stream_bytes + 2 * resident_bytes
    vmem_limit = int(min(max(2 * budget, 32 * 1024 * 1024), 64 * 1024 * 1024))

    flops = 2 * b_pad * (X * H + H * 2 * L + L * H + H * X)
    transcendentals = b_pad * (2 * H + L + X)          # tanh, tanh, exp, sigmoid
    bytes_accessed = (b_pad * (X * 2 + L * 4 + Xp * 2 + 2 * Lp * 4)
                      + int(w_slab.size) * 2 + int(b_all.size) * 4)

    x_hat_pad, heads_pad = pl.pallas_call(
        kernel,
        out_shape=(jax.ShapeDtypeStruct((b_pad, Xp), jnp.bfloat16),
                   jax.ShapeDtypeStruct((b_pad, 2 * Lp), jnp.float32)),
        grid=grid,
        in_specs=[
            pl.BlockSpec((tb, X), lambda i: (i, 0)),        # x tile (bf16)
            pl.BlockSpec((tb, L), lambda i: (i, 0)),        # eps tile (f32)
            pl.BlockSpec(w_slab.shape, lambda i: (0, 0)),   # resident weight slab
            pl.BlockSpec(b_all.shape, lambda i: (0, 0)),    # resident bias slab
        ],
        out_specs=(pl.BlockSpec((tb, Xp), lambda i: (i, 0)),
                   pl.BlockSpec((tb, 2 * Lp), lambda i: (i, 0))),
        compiler_params=pltpu.CompilerParams(
            dimension_semantics=("parallel",),              # batch tiles shard across TCs
            vmem_limit_bytes=vmem_limit,
        ),
        cost_estimate=pl.CostEstimate(
            flops=int(flops),
            transcendentals=int(transcendentals),
            bytes_accessed=int(bytes_accessed)),
    )(x_bf, eps_f, w_slab, b_all)

    x_hat = x_hat_pad[:B, :X].astype(jnp.float32)
    mean = heads_pad[:B, :L]
    log_var = heads_pad[:B, Lp:Lp + L]
    return x_hat, mean, log_var


# ---------------------------------------------------------------------------
# Parameter init / packing / reference
# ---------------------------------------------------------------------------
def init_params(key, x_dim, hidden_dim, latent_dim):
    ks = jax.random.split(key, 10)

    def lin(kw, kb, fan_in, fan_out):
        scale = 1.0 / jnp.sqrt(fan_in)
        w = jax.random.uniform(kw, (fan_in, fan_out), jnp.float32, -scale, scale)
        b = jax.random.uniform(kb, (1, fan_out), jnp.float32, -scale, scale)
        return w, b

    w_e, b_e = lin(ks[0], ks[1], x_dim, hidden_dim)
    w_mu, b_mu = lin(ks[2], ks[3], hidden_dim, latent_dim)
    w_lv, b_lv = lin(ks[4], ks[5], hidden_dim, latent_dim)
    w_d1, b_d1 = lin(ks[6], ks[7], latent_dim, hidden_dim)
    w_d2, b_d2 = lin(ks[8], ks[9], hidden_dim, x_dim)
    return dict(w_e=w_e, b_e=b_e, w_mu=w_mu, b_mu=b_mu, w_lv=w_lv, b_lv=b_lv,
                w_d1=w_d1, b_d1=b_d1, w_d2=w_d2, b_d2=b_d2)


def pack_params(p):
    """Host-side packing: one bf16 weight slab + one 128-aligned f32 bias slab."""
    x_dim, hidden_dim = p["w_e"].shape
    latent_dim = p["w_mu"].shape[1]

    lanes, rows, wrows = _weight_geometry(x_dim, hidden_dim, latent_dim)
    boffs, btotal = _bias_geometry(x_dim, hidden_dim, latent_dim)
    r_e, r_h, r_d1, r_d2 = wrows
    o_e, o_h, o_d1, o_d2 = boffs

    w_heads = jnp.concatenate([p["w_mu"], p["w_lv"]], axis=1)      # [H, 2L]
    b_heads = jnp.concatenate([p["b_mu"], p["b_lv"]], axis=1)      # [1, 2L]

    w_slab = jnp.zeros((rows, lanes), jnp.float32)
    w_slab = w_slab.at[r_e:r_e + x_dim, :hidden_dim].set(p["w_e"])
    w_slab = w_slab.at[r_h:r_h + hidden_dim, :2 * latent_dim].set(w_heads)
    w_slab = w_slab.at[r_d1:r_d1 + latent_dim, :hidden_dim].set(p["w_d1"])
    w_slab = w_slab.at[r_d2:r_d2 + hidden_dim, :x_dim].set(p["w_d2"])
    w_slab = w_slab.astype(jnp.bfloat16)

    b_all = jnp.zeros((1, btotal), jnp.float32)
    b_all = b_all.at[:, o_e:o_e + hidden_dim].set(p["b_e"])
    b_all = b_all.at[:, o_h:o_h + 2 * latent_dim].set(b_heads)
    b_all = b_all.at[:, o_d1:o_d1 + hidden_dim].set(p["b_d1"])
    b_all = b_all.at[:, o_d2:o_d2 + x_dim].set(p["b_d2"])

    bf = jnp.bfloat16
    return dict(
        H=hidden_dim,
        w_slab=w_slab, b_all=b_all, wrows=wrows, boffs=boffs,
        # bf16 weight copies / f32 biases kept only for the reference check
        w_e=p["w_e"].astype(bf), w_heads=w_heads.astype(bf),
        w_d1=p["w_d1"].astype(bf), w_d2=p["w_d2"].astype(bf),
        b_e=p["b_e"], b_heads=b_heads, b_d1=p["b_d1"], b_d2=p["b_d2"],
    )


def vae_reference(x, eps, packed):
    """Pure-JAX reference with matching numerics (bf16 MXU operands, f32 accumulate)."""
    bf, f32 = jnp.bfloat16, jnp.float32
    L = eps.shape[1]
    xb = x.astype(bf)
    h = jnp.tanh(jnp.dot(xb, packed["w_e"], preferred_element_type=f32) + packed["b_e"])
    heads = jnp.dot(h.astype(bf), packed["w_heads"], preferred_element_type=f32) + packed["b_heads"]
    mean = heads[:, :L]
    log_var = heads[:, L:]
    z = mean + jnp.exp(0.5 * log_var) * eps
    hd = jnp.tanh(jnp.dot(z.astype(bf), packed["w_d1"], preferred_element_type=f32) + packed["b_d1"])
    x_hat = jax.nn.sigmoid(jnp.dot(hd.astype(bf), packed["w_d2"], preferred_element_type=f32)
                           + packed["b_d2"])
    return x_hat, mean, log_var


if __name__ == "__main__":
    # conf: BATCH_SIZE=8, IN_DIM=64, LAYERS(hidden)=32, LATENT=16
    B, X, H, L = 8, 64, 32, 16

    key = jax.random.PRNGKey(0)
    k_x, k_eps, k_p = jax.random.split(key, 3)

    x = jax.random.uniform(k_x, (B, X), jnp.float32)        # x.view(batch, x_dim)
    # TODO(synk): torch.randn_like() sampling is done host-side; eps is an explicit input.
    eps = jax.random.normal(k_eps, (B, L), jnp.float32)

    packed = pack_params(init_params(k_p, X, H, L))

    x_hat, mean, log_var = jax.block_until_ready(vae_forward(x, eps, packed))

    xh_ref, mean_ref, lv_ref = vae_reference(x, eps, packed)

    # x_hat is bf16-quantized on the way out (intentional); mean/log_var stay f32.
    assert jnp.allclose(x_hat, xh_ref, atol=1e-2), float(jnp.max(jnp.abs(x_hat - xh_ref)))
    assert jnp.allclose(mean, mean_ref, atol=5e-3), float(jnp.max(jnp.abs(mean - mean_ref)))
    assert jnp.allclose(log_var, lv_ref, atol=5e-3), float(jnp.max(jnp.abs(log_var - lv_ref)))

    print("KERNEL_OK")
</pallas_src>

<mosaic_0001>
module attributes {stable_mosaic.version = 11 : i64} {
  func.func @vae_fused_kernel(%arg0: i32, %arg1: memref<16x64xbf16, #tpu.memory_space<vmem>>, %arg2: memref<16x16xf32, #tpu.memory_space<vmem>>, %arg3: memref<144x128xbf16, #tpu.memory_space<vmem>>, %arg4: memref<1x512xf32, #tpu.memory_space<vmem>>, %arg5: memref<16x128xbf16, #tpu.memory_space<vmem>>, %arg6: memref<16x256xf32, #tpu.memory_space<vmem>>) attributes {dimension_semantics = [#tpu.dimension_semantics<parallel>], iteration_bounds = array<i64: 1>, scalar_prefetch = 0 : i64, scratch_operands = 0 : i64, tpu.core_type = #tpu.core_type<tc>, window_params = [{transform_indices = @transform_0, window_bounds = array<i64: 16, 64>}, {transform_indices = @transform_1, window_bounds = array<i64: 16, 16>}, {pipeline_mode = #tpu.pipeline_mode<synchronous>, transform_indices = @transform_2, window_bounds = array<i64: 144, 128>}, {pipeline_mode = #tpu.pipeline_mode<synchronous>, transform_indices = @transform_3, window_bounds = array<i64: 1, 512>}, {transform_indices = @transform_4, window_bounds = array<i64: 16, 128>}, {transform_indices = @transform_5, window_bounds = array<i64: 16, 256>}]} {
    %c0 = arith.constant 0 : index
    %c0_0 = arith.constant 0 : index
    %0 = vector.load %arg1[%c0, %c0_0] : memref<16x64xbf16, #tpu.memory_space<vmem>>, vector<16x64xbf16>
    %c0_1 = arith.constant 0 : index
    %c0_2 = arith.constant 0 : index
    %1 = vector.load %arg2[%c0_1, %c0_2] : memref<16x16xf32, #tpu.memory_space<vmem>>, vector<16x16xf32>
    %c0_3 = arith.constant 0 : index
    %c0_4 = arith.constant 0 : index
    %2 = vector.load %arg3[%c0_3, %c0_4] : memref<144x128xbf16, #tpu.memory_space<vmem>>, vector<64x32xbf16>
    %c64 = arith.constant 64 : index
    %c0_5 = arith.constant 0 : index
    %3 = vector.load %arg3[%c64, %c0_5] : memref<144x128xbf16, #tpu.memory_space<vmem>>, vector<32x32xbf16>
    %c96 = arith.constant 96 : index
    %c0_6 = arith.constant 0 : index
    %4 = vector.load %arg3[%c96, %c0_6] : memref<144x128xbf16, #tpu.memory_space<vmem>>, vector<16x32xbf16>
    %c112 = arith.constant 112 : index
    %c0_7 = arith.constant 0 : index
    %5 = vector.load %arg3[%c112, %c0_7] : memref<144x128xbf16, #tpu.memory_space<vmem>>, vector<32x64xbf16>
    %c0_8 = arith.constant 0 : index
    %c0_9 = arith.constant 0 : index
    %6 = vector.load %arg4[%c0_8, %c0_9] : memref<1x512xf32, #tpu.memory_space<vmem>>, vector<1x32xf32>
    %c0_10 = arith.constant 0 : index
    %c128 = arith.constant 128 : index
    %7 = vector.load %arg4[%c0_10, %c128] : memref<1x512xf32, #tpu.memory_space<vmem>>, vector<1x32xf32>
    %c0_11 = arith.constant 0 : index
    %c256 = arith.constant 256 : index
    %8 = vector.load %arg4[%c0_11, %c256] : memref<1x512xf32, #tpu.memory_space<vmem>>, vector<1x32xf32>
    %c0_12 = arith.constant 0 : index
    %c384 = arith.constant 384 : index
    %9 = vector.load %arg4[%c0_12, %c384] : memref<1x512xf32, #tpu.memory_space<vmem>>, vector<1x64xf32>
    %cst = arith.constant dense<0.000000e+00> : vector<16x32xf32>
    %10 = tpu.matmul %0, %2, %cst {dimension_numbers = #tpu.dot_dimension_numbers<[1], [0], [0], [1], [0, 0, 1, 1], [], []>} : vector<16x64xbf16>, vector<64x32xbf16>, vector<16x32xf32> -> vector<16x32xf32>
    %11 = vector.broadcast %6 : vector<1x32xf32> to vector<16x32xf32>
    %12 = arith.addf %10, %11 : vector<16x32xf32>
    %13 = math.tanh %12 : vector<16x32xf32>
    %14 = arith.truncf %13 : vector<16x32xf32> to vector<16x32xbf16>
    %cst_13 = arith.constant dense<0.000000e+00> : vector<16x32xf32>
    %15 = tpu.matmul %14, %3, %cst_13 {dimension_numbers = #tpu.dot_dimension_numbers<[1], [0], [0], [1], [0, 0, 1, 1], [], []>} : vector<16x32xbf16>, vector<32x32xbf16>, vector<16x32xf32> -> vector<16x32xf32>
    %16 = vector.broadcast %7 : vector<1x32xf32> to vector<16x32xf32>
    %17 = arith.addf %15, %16 : vector<16x32xf32>
    %18 = vector.extract_strided_slice %17 {offsets = [0, 0], sizes = [16, 16], strides = [1, 1]} : vector<16x32xf32> to vector<16x16xf32>
    %19 = vector.extract_strided_slice %17 {offsets = [0, 16], sizes = [16, 16], strides = [1, 1]} : vector<16x32xf32> to vector<16x16xf32>
    %cst_14 = arith.constant 5.000000e-01 : f32
    %20 = vector.broadcast %cst_14 : f32 to vector<16x16xf32>
    %21 = arith.mulf %20, %19 : vector<16x16xf32>
    %22 = math.exp %21 : vector<16x16xf32>
    %23 = arith.mulf %22, %1 : vector<16x16xf32>
    %24 = arith.addf %18, %23 : vector<16x16xf32>
    %25 = arith.truncf %24 : vector<16x16xf32> to vector<16x16xbf16>
    %cst_15 = arith.constant dense<0.000000e+00> : vector<16x32xf32>
    %26 = tpu.matmul %25, %4, %cst_15 {dimension_numbers = #tpu.dot_dimension_numbers<[1], [0], [0], [1], [0, 0, 1, 1], [], []>} : vector<16x16xbf16>, vector<16x32xbf16>, vector<16x32xf32> -> vector<16x32xf32>
    %27 = vector.broadcast %8 : vector<1x32xf32> to vector<16x32xf32>
    %28 = arith.addf %26, %27 : vector<16x32xf32>
    %29 = math.tanh %28 : vector<16x32xf32>
    %30 = arith.truncf %29 : vector<16x32xf32> to vector<16x32xbf16>
    %cst_16 = arith.constant dense<0.000000e+00> : vector<16x64xf32>
    %31 = tpu.matmul %30, %5, %cst_16 {dimension_numbers = #tpu.dot_dimension_numbers<[1], [0], [0], [1], [0, 0, 1, 1], [], []>} : vector<16x32xbf16>, vector<32x64xbf16>, vector<16x64xf32> -> vector<16x64xf32>
    %32 = vector.broadcast %9 : vector<1x64xf32> to vector<16x64xf32>
    %33 = arith.addf %31, %32 : vector<16x64xf32>
    %34 = arith.negf %33 : vector<16x64xf32>
    %35 = math.exp %34 : vector<16x64xf32>
    %cst_17 = arith.constant 1.000000e+00 : f32
    %36 = vector.broadcast %cst_17 : f32 to vector<16x64xf32>
    %37 = arith.addf %36, %35 : vector<16x64xf32>
    %38 = arith.divf %36, %37 : vector<16x64xf32>
    %39 = arith.truncf %38 : vector<16x64xf32> to vector<16x64xbf16>
    %c0_18 = arith.constant 0 : index
    %c0_19 = arith.constant 0 : index
    %40 = vector.load %arg5[%c0_18, %c0_19] : memref<16x128xbf16, #tpu.memory_space<vmem>>, vector<16x64xbf16>
    tpu.vector_store %arg5[%c0_18, %c0_19], %39 {strides = array<i32>} : memref<16x128xbf16, #tpu.memory_space<vmem>>, vector<16x64xbf16>,
    %c0_20 = arith.constant 0 : index
    %c0_21 = arith.constant 0 : index
    %41 = vector.load %arg6[%c0_20, %c0_21] : memref<16x256xf32, #tpu.memory_space<vmem>>, vector<16x16xf32>
    tpu.vector_store %arg6[%c0_20, %c0_21], %18 {strides = array<i32>} : memref<16x256xf32, #tpu.memory_space<vmem>>, vector<16x16xf32>,
    %c0_22 = arith.constant 0 : index
    %c128_23 = arith.constant 128 : index
    %42 = vector.load %arg6[%c0_22, %c128_23] : memref<16x256xf32, #tpu.memory_space<vmem>>, vector<16x16xf32>
    tpu.vector_store %arg6[%c0_22, %c128_23], %19 {strides = array<i32>} : memref<16x256xf32, #tpu.memory_space<vmem>>, vector<16x16xf32>,
    return
  }
  func.func @transform_0(%arg0: i32) -> (i32, i32) {
    %c0_i32 = arith.constant 0 : i32
    %c0_i32_0 = arith.constant 0 : i32
    return %arg0, %c0_i32 : i32, i32
  }
  func.func @transform_1(%arg0: i32) -> (i32, i32) {
    %c0_i32 = arith.constant 0 : i32
    %c0_i32_0 = arith.constant 0 : i32
    return %arg0, %c0_i32 : i32, i32
  }
  func.func @transform_2(%arg0: i32) -> (i32, i32) {
    %c0_i32 = arith.constant 0 : i32
    %c0_i32_0 = arith.constant 0 : i32
    %c0_i32_1 = arith.constant 0 : i32
    return %c0_i32, %c0_i32_0 : i32, i32
  }
  func.func @transform_3(%arg0: i32) -> (i32, i32) {
    %c0_i32 = arith.constant 0 : i32
    %c0_i32_0 = arith.constant 0 : i32
    %c0_i32_1 = arith.constant 0 : i32
    return %c0_i32, %c0_i32_0 : i32, i32
  }
  func.func @transform_4(%arg0: i32) -> (i32, i32) {
    %c0_i32 = arith.constant 0 : i32
    %c0_i32_0 = arith.constant 0 : i32
    return %arg0, %c0_i32 : i32, i32
  }
  func.func @transform_5(%arg0: i32) -> (i32, i32) {
    %c0_i32 = arith.constant 0 : i32
    %c0_i32_0 = arith.constant 0 : i32
    return %arg0, %c0_i32 : i32, i32
  }
}

</mosaic_0001>

<llo_original>
// kernel: tpu_custom_call.1
$region0: #{tpu_custom_call.1}
  #allocation0 [shape = 'u32[]', space=smem, size = 0x4, offset = 0x4, fixed_abs, tag = 'smem constant byte address 0x4 - core index']
  #allocation1 [shape = 'u32[144,128]{1,0:T(1,128)}', space=vmem, size = 0x12000, scoped, tag = 'internal scratch']
  %s0 = inlined_call_operand.hbm [shape: bf16[16,64], index: 0, kind: input, shape index: {}]
  %s1 = inlined_call_operand.hbm [shape: f32[16,16], index: 1, kind: input, shape index: {}]
  %s2 = inlined_call_operand.hbm [shape: bf16[144,128], index: 2, kind: input, shape index: {}]
  %s3 = inlined_call_operand.vmem [shape: f32[1,512], index: 3, kind: input, shape index: {}]
  %s4 = inlined_call_operand.hbm [shape: bf16[16,128], index: 4, kind: output, shape index: {0}]
  %s5 = inlined_call_operand.hbm [shape: f32[16,256], index: 5, kind: output, shape index: {1}]
  %6 = xla_tuple %s4, %s5
  %s7 = sld [smem:[#allocation0]]
  $region46: #{tpu_custom_call.1} parent=0
    _
  %s9 = ssub.s32 1, %s7
  %s10 = scalar_select 0, %s9, %s7
  $region1: #{tpu_custom_call.1} parent=0
    #allocation2 [shape = 'u8[4096]{0}', space=vmem, size = 0x1000, scoped, tag = 'input window, operand 0, single buffered']
    #allocation3 [shape = 's32[1]{0}', space=sflag, size = 0x4, scoped, tag = 'scoped memory for tpu_custom_call.1']
    #allocation4 [shape = 's32[1]{0}', space=sflag, size = 0x4, scoped, tag = 'scoped memory for tpu_custom_call.1']
    #allocation5 [shape = 'u8[8192]{0}', space=vmem, size = 0x2000, scoped, tag = 'input window, operand 1, single buffered']
    #allocation6 [shape = 's32[1]{0}', space=sflag, size = 0x4, scoped, tag = 'scoped memory for tpu_custom_call.1']
    #allocation7 [shape = 'u8[36864]{0}', space=vmem, size = 0x9000, scoped, tag = 'input window, operand 2, single buffered']
    #allocation8 [shape = 'u8[4096]{0}', space=vmem, size = 0x1000, scoped, tag = 'output window, operand 0, single buffered']
    #allocation9 [shape = 'u8[16384]{0}', space=vmem, size = 0x4000, scoped, tag = 'output window, operand 1, single buffered']
    #allocation10 [shape = 's32[1]{0}', space=sflag, size = 0x4, scoped, tag = 'scoped memory for tpu_custom_call.1']
    %11 = vsyncpa [#allocation3], 0
    %12 = vsyncpa [#allocation6], 0
    %13 = vsyncpa [#allocation4], 0
    %14 = vsyncpa [#allocation10], 0
    // Predicated region
    $region2: #{tpu_custom_call.1} parent=1 // pred_check
      _
    $region3: #{tpu_custom_call.1} parent=1 // pred_check_branch
      %16 = sbr.rel (0) target = $region5
    $region4: #{tpu_custom_call.1} parent=1 // pred_region
      %s18 = ssub.s32 128, 128
      %19 = vsyncadd [#allocation3], %s18
      %s20 = sshll.u32 [#allocation2], 4
      %s21 = int_to_ptr.vmem [resolvable:$true] %s20
      %26 = dma.hbm_to_vmem [thread:$0]  %s0, 128, %s21, [#allocation3], 64, 64, 4
    $region5: #{tpu_custom_call.1} parent=1 // pred_fallthru
      _
    // Predicated region
    $region6: #{tpu_custom_call.1} parent=1 // pred_check
      _
    $region7: #{tpu_custom_call.1} parent=1 // pred_check_branch
      %28 = sbr.rel (0) target = $region9
    $region8: #{tpu_custom_call.1} parent=1 // pred_region
      %s30 = ssub.s32 256, 256
      %31 = vsyncadd [#allocation6], %s30
      %s32 = sshll.u32 [#allocation5], 4
      %s33 = int_to_ptr.vmem [resolvable:$true] %s32
      %38 = dma.hbm_to_vmem [thread:$0]  %s1, 256, %s33, [#allocation6], 128, 128, 8
    $region9: #{tpu_custom_call.1} parent=1 // pred_fallthru
      _
    // Predicated region
    $region10: #{tpu_custom_call.1} parent=1 // pred_check
      _
    $region11: #{tpu_custom_call.1} parent=1 // pred_check_branch
      %40 = sbr.rel (0) target = $region13
    $region12: #{tpu_custom_call.1} parent=1 // pred_region
      %s42 = ssub.s32 1152, 1152
      %43 = vsyncadd [#allocation6], %s42
      %s44 = sshll.u32 [#allocation7], 4
      %s45 = int_to_ptr.vmem [resolvable:$true] %s44
      %50 = dma.hbm_to_vmem [thread:$0]  %s2, 1152, %s45, [#allocation6], 64, 64, 4
    $region13: #{tpu_custom_call.1} parent=1 // pred_fallthru
      _
    // Predicated region
    $region14: #{tpu_custom_call.1} parent=1 // pred_check
      _
    $region15: #{tpu_custom_call.1} parent=1 // pred_check_branch
      %52 = sbr.rel (0) target = $region17
    $region16: #{tpu_custom_call.1} parent=1 // pred_region
      _
    $region17: #{tpu_custom_call.1} parent=1 // pred_fallthru
      _
    // Predicated region
    $region18: #{tpu_custom_call.1} parent=1 // pred_check
      _
    $region19: #{tpu_custom_call.1} parent=1 // pred_check_branch
      %54 = sbr.rel (0) target = $region21
    $region20: #{tpu_custom_call.1} parent=1 // pred_region
      %55 = dma.done [#allocation3], 128
    $region21: #{tpu_custom_call.1} parent=1 // pred_fallthru
      _
    // Predicated region
    $region22: #{tpu_custom_call.1} parent=1 // pred_check
      _
    $region23: #{tpu_custom_call.1} parent=1 // pred_check_branch
      %57 = sbr.rel (0) target = $region25
    $region24: #{tpu_custom_call.1} parent=1 // pred_region
      %58 = dma.done [#allocation6], 256
    $region25: #{tpu_custom_call.1} parent=1 // pred_fallthru
      _
    // Predicated region
    $region26: #{tpu_custom_call.1} parent=1 // pred_check
      _
    $region27: #{tpu_custom_call.1} parent=1 // pred_check_branch
      %60 = sbr.rel (0) target = $region29
    $region28: #{tpu_custom_call.1} parent=1 // pred_region
      %61 = dma.done [#allocation6], 1152
    $region29: #{tpu_custom_call.1} parent=1 // pred_fallthru
      _
    %v63 = vld [vmem:[#allocation2] sm:$0xf]
    %v64 = vld [vmem:[#allocation2 + $0x4] sm:$0xf]
    %v65 = vld [vmem:[#allocation5] sm:$0xff]
    %v66 = vld [vmem:[#allocation5 + $0x8] sm:$0xff]
    %v67 = vld [vmem:[#allocation7] sm:$0xf]
    %v68 = vld [vmem:[#allocation7 + $0x4] sm:$0xf]
    %v69 = vld [vmem:[#allocation7 + $0x8] sm:$0xf]
    %v70 = vld [vmem:[#allocation7 + $0xc] sm:$0xf]
    %v71 = vld [vmem:[#allocation7 + $0x10] sm:$0xf]
    %v72 = vld [vmem:[#allocation7 + $0x14] sm:$0xf]
    %v73 = vld [vmem:[#allocation7 + $0x18] sm:$0xf]
    %v74 = vld [vmem:[#allocation7 + $0x1c] sm:$0xf]
    %v75 = vld [vmem:[#allocation7 + $0x20] sm:$0xf]
    %v76 = vld [vmem:[#allocation7 + $0x24] sm:$0xf]
    %v77 = vld [vmem:[#allocation7 + $0x28] sm:$0xf]
    %v78 = vld [vmem:[#allocation7 + $0x2c] sm:$0xf]
    %v79 = vld [vmem:[#allocation7 + $0x30] sm:$0xf]
    %v80 = vld [vmem:[#allocation7 + $0x34] sm:$0xf]
    %v81 = vld [vmem:[#allocation7 + $0x38] sm:$0xf]
    %v82 = vld [vmem:[#allocation7 + $0x3c] sm:$0xf]
    %v83 = vld [vmem:[#allocation7 + $0x40] sm:$0xf]
    %v84 = vld [vmem:[#allocation7 + $0x44] sm:$0xf]
    %v85 = vld [vmem:[%s3] sm:$0x1]
    %v86 = vld [vmem:[%s3 + $0x1] sm:$0x1]
    %v87 = vld [vmem:[%s3 + $0x2] sm:$0x1]
    %v88 = vld [vmem:[%s3 + $0x3] sm:$0x1]
    %v90 = vlaneseq
    %v91 = vshrl.u32 %v90, 7
    %v92 = vsub.s32 0, %v91
    %v93 = vrot.slane %v85, %v92
    %v97 = vunpack.c.l.b16 %v63
    %v98 = vunpack.c.l.b16 %v64
    %v99 = vpack.c.b16 %v98, %v97
    %v108 = vunpack.c.l.b16 %v67
    %v109 = vunpack.c.l.b16 %v68
    %v110 = vunpack.c.l.b16 %v69
    %v111 = vunpack.c.l.b16 %v70
    %v112 = vunpack.c.l.b16 %v71
    %v113 = vunpack.c.l.b16 %v72
    %v114 = vunpack.c.l.b16 %v73
    %v115 = vunpack.c.l.b16 %v74
    %v116 = vpack.c.b16 %v109, %v108
    %v117 = vpack.c.b16 %v111, %v110
    %v118 = vpack.c.b16 %v113, %v112
    %v119 = vpack.c.b16 %v115, %v114
    %vm124 = vcmask 523264
    %v126 = vsel %vm124, %v99, 0
    %128 = vmatprep.subr.bf16.mxu0 0
    %129 = vmatpush1.bf16.msra.mxu0 0
    %130 = vmatprep.subr.bf16.mxu0 0
    %131 = vmatpush1.bf16.msra.mxu0 0
    %132 = vmatprep.subr.bf16.mxu0 0
    %133 = vmatpush1.bf16.msra.mxu0 0
    %134 = vmatprep.subr.bf16.mxu0 0
    %135 = vmatpush1.bf16.msra.mxu0 0
    %136 = vmatprep.subr.bf16.mxu0 0
    %137 = vmatpush1.bf16.msra.mxu0 %v119
    %138 = vmatprep.subr.bf16.mxu0 0
    %139 = vmatpush1.bf16.msra.mxu0 %v118
    %140 = vmatprep.subr.bf16.mxu0 0
    %141 = vmatpush1.bf16.msra.mxu0 %v117
    %142 = vmatprep.subr.bf16.mxu0 0
    %143 = vmatpush1.bf16.msra.mxu0 %v116
    %144 = vmatprep.subr.bf16.mxu0 0
    %145 = vmatpush2.bf16.msra.mxu0 0
    %146 = vmatprep.subr.bf16.mxu0 0
    %147 = vmatpush2.bf16.msra.mxu0 0
    %148 = vmatprep.subr.bf16.mxu0 0
    %149 = vmatpush2.bf16.msra.mxu0 0
    %150 = vmatprep.subr.bf16.mxu0 0
    %151 = vmatpush2.bf16.msra.mxu0 0
    %152 = vmatprep.subr.bf16.mxu0 0
    %153 = vmatpush2.bf16.msra.mxu0 0
    %154 = vmatprep.subr.bf16.mxu0 0
    %155 = vmatpush2.bf16.msra.mxu0 0
    %156 = vmatprep.subr.bf16.mxu0 0
    %157 = vmatpush2.bf16.msra.mxu0 0
    %158 = vmatprep.subr.bf16.mxu0 0
    %159 = vmatpush2.bf16.msra.mxu0 0
    %160 = vmatprep.mubr.bf16.mxu0 0
    %161 = vmatmul.mubr.bf16.gmra.mxu0 %v126
    %v162 = vpop.f32.mrf.mxu0
    %v163 = vadd.f32 %v93, %v162
    %v164 = vpop.f32.mrf.mxu0
    %v165 = vpop.f32.mrf.mxu0
    %v166 = vadd.f32 %v93, %v165
    %v167 = vpop.f32.mrf.mxu0
    %168 = vdwg.mxu0
    %v169 = vtanh.pop %v163
    %v170 = vtanh.pop %v166
    %v171 = vpack.c.bf16 %v170, %v169
    %v173 = vlaneseq
    %v174 = vshrl.u32 %v173, 7
    %v175 = vsub.s32 0, %v174
    %v176 = vrot.slane %v86, %v175
    %v182 = vunpack.c.l.b16 %v75
    %v183 = vunpack.c.l.b16 %v76
    %v184 = vunpack.c.l.b16 %v77
    %v185 = vunpack.c.l.b16 %v78
    %v186 = vpack.c.b16 %v183, %v182
    %v187 = vpack.c.b16 %v185, %v184
    %vm190 = vcmask 261120
    %v192 = vsel %vm190, %v171, 0
    %194 = vmatprep.subr.bf16.mxu0 0
    %195 = vmatpush1.bf16.msra.mxu0 0
    %196 = vmatprep.subr.bf16.mxu0 0
    %197 = vmatpush1.bf16.msra.mxu0 0
    %198 = vmatprep.subr.bf16.mxu0 0
    %199 = vmatpush1.bf16.msra.mxu0 0
    %200 = vmatprep.subr.bf16.mxu0 0
    %201 = vmatpush1.bf16.msra.mxu0 0
    %202 = vmatprep.subr.bf16.mxu0 0
    %203 = vmatpush1.bf16.msra.mxu0 0
    %204 = vmatprep.subr.bf16.mxu0 0
    %205 = vmatpush1.bf16.msra.mxu0 0
    %206 = vmatprep.subr.bf16.mxu0 0
    %207 = vmatpush1.bf16.msra.mxu0 %v187
    %208 = vmatprep.subr.bf16.mxu0 0
    %209 = vmatpush1.bf16.msra.mxu0 %v186
    %210 = vmatprep.subr.bf16.mxu0 0
    %211 = vmatpush2.bf16.msra.mxu0 0
    %212 = vmatprep.subr.bf16.mxu0 0
    %213 = vmatpush2.bf16.msra.mxu0 0
    %214 = vmatprep.subr.bf16.mxu0 0
    %215 = vmatpush2.bf16.msra.mxu0 0
    %216 = vmatprep.subr.bf16.mxu0 0
    %217 = vmatpush2.bf16.msra.mxu0 0
    %218 = vmatprep.subr.bf16.mxu0 0
    %219 = vmatpush2.bf16.msra.mxu0 0
    %220 = vmatprep.subr.bf16.mxu0 0
    %221 = vmatpush2.bf16.msra.mxu0 0
    %222 = vmatprep.subr.bf16.mxu0 0
    %223 = vmatpush2.bf16.msra.mxu0 0
    %224 = vmatprep.subr.bf16.mxu0 0
    %225 = vmatpush2.bf16.msra.mxu0 0
    %226 = vmatprep.mubr.bf16.mxu0 0
    %227 = vmatmul.mubr.bf16.gmra.mxu0 %v192
    %v228 = vpop.f32.mrf.mxu0
    %v229 = vadd.f32 %v176, %v228
    %v230 = vpop.f32.mrf.mxu0
    %v231 = vpop.f32.mrf.mxu0
    %v232 = vadd.f32 %v176, %v231
    %v233 = vpop.f32.mrf.mxu0
    %234 = vdwg.mxu0
    %v235 = vmul.f32 %v229, 0.5
    %v236 = vmul.f32 %v232, 0.5
    %v237 = vmul.f32 %v235, 1.442695
    %v238 = vpow.pop %v237
    %v239 = vmul.f32 %v236, 1.442695
    %v240 = vpow.pop %v239
    %243 = vrot.lane.b32.xlu0 %v65, 16
    %v244 = vpop.permute.xlu0 %243
    %245 = vrot.lane.b32.xlu0 %v66, 16
    %v246 = vpop.permute.xlu0 %245
    %v249 = vmul.f32 %v238, %v244
    %v250 = vmul.f32 %v240, %v246
    %253 = vrot.lane.b32.xlu0 %v249, 112
    %v254 = vpop.permute.xlu0 %253
    %255 = vrot.lane.b32.xlu0 %v250, 112
    %v256 = vpop.permute.xlu0 %255
    %v259 = vadd.f32 %v229, %v254
    %v260 = vadd.f32 %v232, %v256
    %v261 = vpack.c.bf16 %v260, %v259
    %v263 = vlaneseq
    %v264 = vshrl.u32 %v263, 7
    %v265 = vsub.s32 0, %v264
    %v266 = vrot.slane %v87, %v265
    %v270 = vunpack.c.l.b16 %v79
    %v271 = vunpack.c.l.b16 %v80
    %v272 = vpack.c.b16 %v271, %v270
    %vm274 = vcmask 130048
    %v276 = vsel %vm274, %v261, 0
    %278 = vmatprep.subr.bf16.mxu0 0
    %279 = vmatpush1.bf16.msra.mxu0 0
    %280 = vmatprep.subr.bf16.mxu0 0
    %281 = vmatpush1.bf16.msra.mxu0 0
    %282 = vmatprep.subr.bf16.mxu0 0
    %283 = vmatpush1.bf16.msra.mxu0 0
    %284 = vmatprep.subr.bf16.mxu0 0
    %285 = vmatpush1.bf16.msra.mxu0 0
    %286 = vmatprep.subr.bf16.mxu0 0
    %287 = vmatpush1.bf16.msra.mxu0 0
    %288 = vmatprep.subr.bf16.mxu0 0
    %289 = vmatpush1.bf16.msra.mxu0 0
    %290 = vmatprep.subr.bf16.mxu0 0
    %291 = vmatpush1.bf16.msra.mxu0 0
    %292 = vmatprep.subr.bf16.mxu0 0
    %293 = vmatpush1.bf16.msra.mxu0 %v272
    %294 = vmatprep.subr.bf16.mxu0 0
    %295 = vmatpush2.bf16.msra.mxu0 0
    %296 = vmatprep.subr.bf16.mxu0 0
    %297 = vmatpush2.bf16.msra.mxu0 0
    %298 = vmatprep.subr.bf16.mxu0 0
    %299 = vmatpush2.bf16.msra.mxu0 0
    %300 = vmatprep.subr.bf16.mxu0 0
    %301 = vmatpush2.bf16.msra.mxu0 0
    %302 = vmatprep.subr.bf16.mxu0 0
    %303 = vmatpush2.bf16.msra.mxu0 0
    %304 = vmatprep.subr.bf16.mxu0 0
    %305 = vmatpush2.bf16.msra.mxu0 0
    %306 = vmatprep.subr.bf16.mxu0 0
    %307 = vmatpush2.bf16.msra.mxu0 0
    %308 = vmatprep.subr.bf16.mxu0 0
    %309 = vmatpush2.bf16.msra.mxu0 0
    %310 = vmatprep.mubr.bf16.mxu0 0
    %311 = vmatmul.mubr.bf16.gmra.mxu0 %v276
    %v312 = vpop.f32.mrf.mxu0
    %v313 = vadd.f32 %v266, %v312
    %v314 = vpop.f32.mrf.mxu0
    %v315 = vpop.f32.mrf.mxu0
    %v316 = vadd.f32 %v266, %v315
    %v317 = vpop.f32.mrf.mxu0
    %318 = vdwg.mxu0
    %v319 = vtanh.pop %v313
    %v320 = vtanh.pop %v316
    %v321 = vpack.c.bf16 %v320, %v319
    %v323 = vlaneseq
    %v324 = vshrl.u32 %v323, 7
    %v325 = vsub.s32 0, %v324
    %v326 = vrot.slane %v88, %v325
    %v332 = vunpack.c.l.b16 %v81
    %v333 = vunpack.c.l.b16 %v82
    %v334 = vunpack.c.l.b16 %v83
    %v335 = vunpack.c.l.b16 %v84
    %v336 = vpack.c.b16 %v333, %v332
    %v337 = vpack.c.b16 %v335, %v334
    %v341 = vsel %vm190, %v321, 0
    %343 = vmatprep.subr.bf16.mxu0 0
    %344 = vmatpush1.bf16.msra.mxu0 0
    %345 = vmatprep.subr.bf16.mxu0 0
    %346 = vmatpush1.bf16.msra.mxu0 0
    %347 = vmatprep.subr.bf16.mxu0 0
    %348 = vmatpush1.bf16.msra.mxu0 0
    %349 = vmatprep.subr.bf16.mxu0 0
    %350 = vmatpush1.bf16.msra.mxu0 0
    %351 = vmatprep.subr.bf16.mxu0 0
    %352 = vmatpush1.bf16.msra.mxu0 0
    %353 = vmatprep.subr.bf16.mxu0 0
    %354 = vmatpush1.bf16.msra.mxu0 0
    %355 = vmatprep.subr.bf16.mxu0 0
    %356 = vmatpush1.bf16.msra.mxu0 %v337
    %357 = vmatprep.subr.bf16.mxu0 0
    %358 = vmatpush1.bf16.msra.mxu0 %v336
    %359 = vmatprep.subr.bf16.mxu0 0
    %360 = vmatpush2.bf16.msra.mxu0 0
    %361 = vmatprep.subr.bf16.mxu0 0
    %362 = vmatpush2.bf16.msra.mxu0 0
    %363 = vmatprep.subr.bf16.mxu0 0
    %364 = vmatpush2.bf16.msra.mxu0 0
    %365 = vmatprep.subr.bf16.mxu0 0
    %366 = vmatpush2.bf16.msra.mxu0 0
    %367 = vmatprep.subr.bf16.mxu0 0
    %368 = vmatpush2.bf16.msra.mxu0 0
    %369 = vmatprep.subr.bf16.mxu0 0
    %370 = vmatpush2.bf16.msra.mxu0 0
    %371 = vmatprep.subr.bf16.mxu0 0
    %372 = vmatpush2.bf16.msra.mxu0 0
    %373 = vmatprep.subr.bf16.mxu0 0
    %374 = vmatpush2.bf16.msra.mxu0 0
    %375 = vmatprep.mubr.bf16.mxu0 0
    %376 = vmatmul.mubr.bf16.gmra.mxu0 %v341
    %v377 = vpop.f32.mrf.mxu0
    %v378 = vadd.f32 %v326, %v377
    %v379 = vpop.f32.mrf.mxu0
    %v380 = vpop.f32.mrf.mxu0
    %v381 = vadd.f32 %v326, %v380
    %v382 = vpop.f32.mrf.mxu0
    %383 = vdwg.mxu0
    %v384 = vxor.u32 %v378, 2147483648
    %v385 = vxor.u32 %v381, 2147483648
    %v386 = vmul.f32 %v384, 1.442695
    %v387 = vpow.pop %v386
    %v388 = vmul.f32 %v385, 1.442695
    %v389 = vpow.pop %v388
    %v390 = vadd.f32 %v387, 1.0
    %v391 = vadd.f32 %v389, 1.0
    %v392 = vrcp.pop %v390
    %v393 = vmul.f32 1.0, %v392
    %v394 = vrcp.pop %v391
    %v395 = vmul.f32 1.0, %v394
    %v396 = vpack.c.bf16 %v395, %v393
    %v398 = vunpack.c.l.b16 %v396
    %v399 = vunpack.c.h.b16 %v396
    %v400 = vpack.c.b16 %v398, %v398
    %v401 = vpack.c.b16 %v399, %v399
    %vm404 = vcmask 519168
    %405 = vst.msk [vmem:[#allocation8] sm:$0xf] %vm404, %v400
    %406 = vst.msk [vmem:[#allocation8 + $0x4] sm:$0xf] %vm404, %v401
    %407 = vst.msk [vmem:[#allocation9] sm:$0xff] %vm274, %v229
    %408 = vst.msk [vmem:[#allocation9 + $0x10] sm:$0xff] %vm274, %v232
    %411 = vrot.lane.b32.xlu0 %v229, 112
    %v412 = vpop.permute.xlu0 %411
    %413 = vrot.lane.b32.xlu0 %v232, 112
    %v414 = vpop.permute.xlu0 %413
    %417 = vst.msk [vmem:[#allocation9 + $0x8] sm:$0xff] %vm274, %v412
    %418 = vst.msk [vmem:[#allocation9 + $0x18] sm:$0xff] %vm274, %v414
    // Predicated region
    $region30: #{tpu_custom_call.1} parent=1 // pred_check
      _
    $region31: #{tpu_custom_call.1} parent=1 // pred_check_branch
      %420 = sbr.rel (0) target = $region33
    $region32: #{tpu_custom_call.1} parent=1 // pred_region
      %s422 = ssub.s32 128, 128
      %423 = vsyncadd [#allocation4], %s422
      %s424 = sshll.u32 [#allocation8], 4
      %s425 = int_to_ptr.vmem [resolvable:$true] %s424
      %430 = dma.vmem_to_hbm [thread:$0]  %s425, 128, %s4, [#allocation4], 64, 64, 4
    $region33: #{tpu_custom_call.1} parent=1 // pred_fallthru
      _
    // Predicated region
    $region34: #{tpu_custom_call.1} parent=1 // pred_check
      _
    $region35: #{tpu_custom_call.1} parent=1 // pred_check_branch
      %432 = sbr.rel (0) target = $region37
    $region36: #{tpu_custom_call.1} parent=1 // pred_region
      %s434 = ssub.s32 512, 512
      %435 = vsyncadd [#allocation10], %s434
      %s436 = sshll.u32 [#allocation9], 4
      %s437 = int_to_ptr.vmem [resolvable:$true] %s436
      %442 = dma.vmem_to_hbm [thread:$0]  %s437, 512, %s5, [#allocation10], 256, 256, 16
    $region37: #{tpu_custom_call.1} parent=1 // pred_fallthru
      _
    // Predicated region
    $region38: #{tpu_custom_call.1} parent=1 // pred_check
      _
    $region39: #{tpu_custom_call.1} parent=1 // pred_check_branch
      %444 = sbr.rel (0) target = $region41
    $region40: #{tpu_custom_call.1} parent=1 // pred_region
      %445 = dma.done [#allocation4], 128
    $region41: #{tpu_custom_call.1} parent=1 // pred_fallthru
      _
    // Predicated region
    $region42: #{tpu_custom_call.1} parent=1 // pred_check
      _
    $region43: #{tpu_custom_call.1} parent=1 // pred_check_branch
      %447 = sbr.rel (0) target = $region45
    $region44: #{tpu_custom_call.1} parent=1 // pred_region
      %448 = dma.done [#allocation10], 512
    $region45: #{tpu_custom_call.1} parent=1 // pred_fallthru
      _
    %449 = vsyncpa [#allocation3], 1
    %450 = vsyncpa [#allocation6], 1
    %451 = vsyncpa [#allocation4], 1
    %452 = vsyncpa [#allocation10], 1

</llo_original>
